<compile_context>
chip_gen: v6e
topology: v6e:2x2x1
jax: 0.10.0
libtpu: 0.0.40
codegen_flags: <defaults>
</compile_context>

<pallas_src>
import jax
import jax.numpy as jnp
from jax.experimental import pallas as pl
from jax.experimental.pallas import tpu as pltpu

STATE = 2
HIDDEN = 50


def odefunc_kernel(x_ref, w1_ref, b1_ref, w2_ref, b2_ref, o_ref):
    # x_ref: (2, NT)   w1_ref: (50, 2)  b1_ref: (50, 1)
    # w2_ref: (2, 50)  b2_ref: (2, 1)   o_ref: (2, NT)
    #
    # First layer: K=2 contraction as two broadcast FMAs on the VPU (an MXU
    # matmul with K=2 would be ~1% utilized and pay push/pop latency for
    # nothing).  Bias broadcast once per tile.
    h_pre = (w1_ref[:, 0:1] * x_ref[0:1, :]
             + w1_ref[:, 1:2] * x_ref[1:2, :]
             + b1_ref[...])                                   # (50, NT)
    h = jnp.tanh(h_pre)                                       # EUP slot

    # Second layer: K=50 contraction on the MXU.  Full-f32 passes so we match
    # an f32 reference bit-closely (default precision may take a bf16 path).
    y = jnp.dot(w2_ref[...], h,
                preferred_element_type=jnp.float32,
                precision=jax.lax.Precision.HIGHEST) + b2_ref[...]

    # Single contiguous, lane-dense store of the whole (2, NT) tile.
    o_ref[...] = y.astype(o_ref.dtype)


def _round_up(a, b):
    return pl.cdiv(a, b) * b


def odefunc_forward(t, x, params, *, n_tile_max=32768):
    """x: (2, N) float32  ->  (2, N) float32.  `t` is unused (as in PyTorch)."""
    del t
    w1, b1, w2, b2 = params
    n = x.shape[1]

    # Lane-dense tile: always a multiple of 128 (or the full array dim when
    # N <= 128).  No wrapper pad / slice: ragged last tiles are handled by
    # Pallas partial-block semantics (masked boundary store).
    n_tile_max = max(128, _round_up(int(n_tile_max), 128))
    if n <= 128:
        n_tile = n                      # block == full array dim (allowed)
    else:
        n_tile = min(n_tile_max, _round_up(n, 128))
        # v7x megacore: if everything fits a single tile, split it so both
        # TensorCores get work on the "parallel" grid axis.
        if pl.cdiv(n, n_tile) == 1 and n > 256:
            n_tile = max(128, _round_up(pl.cdiv(n, 2), 128))
    grid = pl.cdiv(n, n_tile)

    cost = pl.CostEstimate(
        flops=2 * (STATE * HIDDEN + HIDDEN * STATE) * n,      # both layers
        transcendentals=HIDDEN * n,                           # tanh
        bytes_accessed=4 * (2 * STATE * n                     # x in + y out
                            + 2 * HIDDEN * STATE + HIDDEN + STATE),
    )

    return pl.pallas_call(
        odefunc_kernel,
        out_shape=jax.ShapeDtypeStruct((STATE, n), jnp.float32),
        grid=(grid,),
        in_specs=[
            pl.BlockSpec((STATE, n_tile), lambda i: (0, i)),   # x tile (pipelined)
            pl.BlockSpec((HIDDEN, STATE), lambda i: (0, 0)),   # W1 (VMEM-resident)
            pl.BlockSpec((HIDDEN, 1), lambda i: (0, 0)),       # b1 (VMEM-resident)
            pl.BlockSpec((STATE, HIDDEN), lambda i: (0, 0)),   # W2 (VMEM-resident)
            pl.BlockSpec((STATE, 1), lambda i: (0, 0)),        # b2 (VMEM-resident)
        ],
        out_specs=pl.BlockSpec((STATE, n_tile), lambda i: (0, i)),
        compiler_params=pltpu.CompilerParams(
            dimension_semantics=("parallel",),        # both TCs on v7x; no-op elsewhere
            vmem_limit_bytes=48 * 1024 * 1024,        # fits v7x 64 MiB, headroom elsewhere
        ),
        cost_estimate=cost,
    )(x, w1, b1, w2, b2)


def init_params(key):
    # nn.init.normal_(weight, mean=0, std=0.1); bias = 0, PyTorch-native shapes.
    k1, k2 = jax.random.split(key)
    w1 = 0.1 * jax.random.normal(k1, (HIDDEN, STATE), dtype=jnp.float32)  # (50, 2)
    b1 = jnp.zeros((HIDDEN, 1), dtype=jnp.float32)                        # (50, 1)
    w2 = 0.1 * jax.random.normal(k2, (STATE, HIDDEN), dtype=jnp.float32)  # (2, 50)
    b2 = jnp.zeros((STATE, 1), dtype=jnp.float32)                         # (2, 1)
    return w1, b1, w2, b2


def _reference(x, params):
    w1, b1, w2, b2 = params
    return w2 @ jnp.tanh(w1 @ x + b1) + b2


if __name__ == "__main__":
    key = jax.random.PRNGKey(0)
    pkey, xkey1, xkey2 = jax.random.split(key, 3)

    params = init_params(pkey)
    t = jnp.float32(0.0)

    # Small batch, module-native (2, N) layout (single full-array block path).
    N1 = 16
    x1 = jax.random.normal(xkey1, (STATE, N1), dtype=jnp.float32)
    y1 = jax.block_until_ready(odefunc_forward(t, x1, params))
    assert y1.shape == (STATE, N1)
    assert jnp.allclose(y1, _reference(x1, params), atol=1e-5, rtol=1e-5)

    # Non-lane-aligned batch: exercises the multi-tile grid + ragged last
    # block (no wrapper pad/slice).
    N2 = 300
    x2 = jax.random.normal(xkey2, (STATE, N2), dtype=jnp.float32)
    y2 = jax.block_until_ready(odefunc_forward(t, x2, params))
    assert y2.shape == (STATE, N2)
    assert jnp.allclose(y2, _reference(x2, params), atol=1e-5, rtol=1e-5)

    print("KERNEL_OK")
</pallas_src>

<mosaic_0001>
module attributes {stable_mosaic.version = 11 : i64} {
  func.func @odefunc_kernel(%arg0: i32, %arg1: memref<2x16xf32, #tpu.memory_space<vmem>>, %arg2: memref<50x2xf32, #tpu.memory_space<vmem>>, %arg3: memref<50x1xf32, #tpu.memory_space<vmem>>, %arg4: memref<2x50xf32, #tpu.memory_space<vmem>>, %arg5: memref<2x1xf32, #tpu.memory_space<vmem>>, %arg6: memref<2x16xf32, #tpu.memory_space<vmem>>) attributes {dimension_semantics = [#tpu.dimension_semantics<parallel>], iteration_bounds = array<i64: 1>, scalar_prefetch = 0 : i64, scratch_operands = 0 : i64, tpu.core_type = #tpu.core_type<tc>, window_params = [{transform_indices = @transform_0, window_bounds = array<i64: 2, 16>}, {pipeline_mode = #tpu.pipeline_mode<synchronous>, transform_indices = @transform_1, window_bounds = array<i64: 50, 2>}, {pipeline_mode = #tpu.pipeline_mode<synchronous>, transform_indices = @transform_2, window_bounds = array<i64: 50, 1>}, {pipeline_mode = #tpu.pipeline_mode<synchronous>, transform_indices = @transform_3, window_bounds = array<i64: 2, 50>}, {pipeline_mode = #tpu.pipeline_mode<synchronous>, transform_indices = @transform_4, window_bounds = array<i64: 2, 1>}, {transform_indices = @transform_5, window_bounds = array<i64: 2, 16>}]} {
    %c0 = arith.constant 0 : index
    %c0_0 = arith.constant 0 : index
    %0 = vector.load %arg2[%c0, %c0_0] : memref<50x2xf32, #tpu.memory_space<vmem>>, vector<50x1xf32>
    %c0_1 = arith.constant 0 : index
    %c0_2 = arith.constant 0 : index
    %1 = vector.load %arg1[%c0_1, %c0_2] : memref<2x16xf32, #tpu.memory_space<vmem>>, vector<1x16xf32>
    %2 = vector.broadcast %0 : vector<50x1xf32> to vector<50x16xf32>
    %3 = vector.broadcast %1 : vector<1x16xf32> to vector<50x16xf32>
    %4 = arith.mulf %2, %3 : vector<50x16xf32>
    %c0_3 = arith.constant 0 : index
    %c1 = arith.constant 1 : index
    %5 = vector.load %arg2[%c0_3, %c1] : memref<50x2xf32, #tpu.memory_space<vmem>>, vector<50x1xf32>
    %c1_4 = arith.constant 1 : index
    %c0_5 = arith.constant 0 : index
    %6 = vector.load %arg1[%c1_4, %c0_5] : memref<2x16xf32, #tpu.memory_space<vmem>>, vector<1x16xf32>
    %7 = vector.broadcast %5 : vector<50x1xf32> to vector<50x16xf32>
    %8 = vector.broadcast %6 : vector<1x16xf32> to vector<50x16xf32>
    %9 = arith.mulf %7, %8 : vector<50x16xf32>
    %10 = arith.addf %4, %9 : vector<50x16xf32>
    %c0_6 = arith.constant 0 : index
    %c0_7 = arith.constant 0 : index
    %11 = vector.load %arg3[%c0_6, %c0_7] : memref<50x1xf32, #tpu.memory_space<vmem>>, vector<50x1xf32>
    %12 = vector.broadcast %11 : vector<50x1xf32> to vector<50x16xf32>
    %13 = arith.addf %10, %12 : vector<50x16xf32>
    %14 = math.tanh %13 : vector<50x16xf32>
    %c0_8 = arith.constant 0 : index
    %c0_9 = arith.constant 0 : index
    %15 = vector.load %arg4[%c0_8, %c0_9] : memref<2x50xf32, #tpu.memory_space<vmem>>, vector<2x50xf32>
    %cst = arith.constant dense<0.000000e+00> : vector<2x16xf32>
    %16 = tpu.matmul %15, %14, %cst {dimension_numbers = #tpu.dot_dimension_numbers<[1], [0], [0], [1], [0, 0, 1, 1], [], []>, precision = #tpu.contract_precision<fp32>} : vector<2x50xf32>, vector<50x16xf32>, vector<2x16xf32> -> vector<2x16xf32>
    %c0_10 = arith.constant 0 : index
    %c0_11 = arith.constant 0 : index
    %17 = vector.load %arg5[%c0_10, %c0_11] : memref<2x1xf32, #tpu.memory_space<vmem>>, vector<2x1xf32>
    %18 = vector.broadcast %17 : vector<2x1xf32> to vector<2x16xf32>
    %19 = arith.addf %16, %18 : vector<2x16xf32>
    %c0_12 = arith.constant 0 : index
    %c0_13 = arith.constant 0 : index
    %20 = vector.load %arg6[%c0_12, %c0_13] : memref<2x16xf32, #tpu.memory_space<vmem>>, vector<2x16xf32>
    tpu.vector_store %arg6[%c0_12, %c0_13], %19 {strides = array<i32>} : memref<2x16xf32, #tpu.memory_space<vmem>>, vector<2x16xf32>,
    return
  }
  func.func @transform_0(%arg0: i32) -> (i32, i32) {
    %c0_i32 = arith.constant 0 : i32
    %c0_i32_0 = arith.constant 0 : i32
    return %c0_i32, %arg0 : i32, i32
  }
  func.func @transform_1(%arg0: i32) -> (i32, i32) {
    %c0_i32 = arith.constant 0 : i32
    %c0_i32_0 = arith.constant 0 : i32
    %c0_i32_1 = arith.constant 0 : i32
    return %c0_i32, %c0_i32_0 : i32, i32
  }
  func.func @transform_2(%arg0: i32) -> (i32, i32) {
    %c0_i32 = arith.constant 0 : i32
    %c0_i32_0 = arith.constant 0 : i32
    %c0_i32_1 = arith.constant 0 : i32
    return %c0_i32, %c0_i32_0 : i32, i32
  }
  func.func @transform_3(%arg0: i32) -> (i32, i32) {
    %c0_i32 = arith.constant 0 : i32
    %c0_i32_0 = arith.constant 0 : i32
    %c0_i32_1 = arith.constant 0 : i32
    return %c0_i32, %c0_i32_0 : i32, i32
  }
  func.func @transform_4(%arg0: i32) -> (i32, i32) {
    %c0_i32 = arith.constant 0 : i32
    %c0_i32_0 = arith.constant 0 : i32
    %c0_i32_1 = arith.constant 0 : i32
    return %c0_i32, %c0_i32_0 : i32, i32
  }
  func.func @transform_5(%arg0: i32) -> (i32, i32) {
    %c0_i32 = arith.constant 0 : i32
    %c0_i32_0 = arith.constant 0 : i32
    return %c0_i32, %arg0 : i32, i32
  }
}

</mosaic_0001>

<llo_original>
// kernel: tpu_custom_call.1
$region0: #{tpu_custom_call.1}
  #allocation0 [shape = 'u32[]', space=smem, size = 0x4, offset = 0x4, fixed_abs, tag = 'smem constant byte address 0x4 - core index']
  #allocation1 [shape = 'u32[144,128]{1,0:T(1,128)}', space=vmem, size = 0x12000, scoped, tag = 'internal scratch']
  %s0 = inlined_call_operand.vmem [shape: f32[2,16], index: 0, kind: input, shape index: {}]
  %s1 = inlined_call_operand.vmem [shape: f32[50,2], index: 1, kind: input, shape index: {}]
  %s2 = inlined_call_operand.vmem [shape: f32[50,1], index: 2, kind: input, shape index: {}]
  %s3 = inlined_call_operand.vmem [shape: f32[2,50], index: 3, kind: input, shape index: {}]
  %s4 = inlined_call_operand.vmem [shape: f32[2,1], index: 4, kind: input, shape index: {}]
  %s5 = inlined_call_operand.hbm [shape: f32[2,16], index: 5, kind: output, shape index: {}]
  %s6 = sld [smem:[#allocation0]]
  $region30: #{tpu_custom_call.1} parent=0
    _
  %s8 = ssub.s32 1, %s6
  %s9 = scalar_select 0, %s8, %s6
  $region1: #{tpu_custom_call.1} parent=0
    #allocation2 [shape = 'u8[1024]{0}', space=vmem, size = 0x400, scoped, tag = 'output window, operand 0, single buffered']
    #allocation3 [shape = 's32[1]{0}', space=sflag, size = 0x4, scoped, tag = 'scoped memory for tpu_custom_call.1']
    %10 = vsyncpa [#allocation3], 0
    // Predicated region
    $region2: #{tpu_custom_call.1} parent=1 // pred_check
      _
    $region3: #{tpu_custom_call.1} parent=1 // pred_check_branch
      %12 = sbr.rel (0) target = $region5
    $region4: #{tpu_custom_call.1} parent=1 // pred_region
      _
    $region5: #{tpu_custom_call.1} parent=1 // pred_fallthru
      _
    // Predicated region
    $region6: #{tpu_custom_call.1} parent=1 // pred_check
      _
    $region7: #{tpu_custom_call.1} parent=1 // pred_check_branch
      %14 = sbr.rel (0) target = $region9
    $region8: #{tpu_custom_call.1} parent=1 // pred_region
      _
    $region9: #{tpu_custom_call.1} parent=1 // pred_fallthru
      _
    // Predicated region
    $region10: #{tpu_custom_call.1} parent=1 // pred_check
      _
    $region11: #{tpu_custom_call.1} parent=1 // pred_check_branch
      %16 = sbr.rel (0) target = $region13
    $region12: #{tpu_custom_call.1} parent=1 // pred_region
      _
    $region13: #{tpu_custom_call.1} parent=1 // pred_fallthru
      _
    // Predicated region
    $region14: #{tpu_custom_call.1} parent=1 // pred_check
      _
    $region15: #{tpu_custom_call.1} parent=1 // pred_check_branch
      %18 = sbr.rel (0) target = $region17
    $region16: #{tpu_custom_call.1} parent=1 // pred_region
      _
    $region17: #{tpu_custom_call.1} parent=1 // pred_fallthru
      _
    // Predicated region
    $region18: #{tpu_custom_call.1} parent=1 // pred_check
      _
    $region19: #{tpu_custom_call.1} parent=1 // pred_check_branch
      %20 = sbr.rel (0) target = $region21
    $region20: #{tpu_custom_call.1} parent=1 // pred_region
      _
    $region21: #{tpu_custom_call.1} parent=1 // pred_fallthru
      _
    %v21 = vld [vmem:[%s1] sm:$0xff]
    %v22 = vld [vmem:[%s1 + $0x8] sm:$0xff]
    %v23 = vld [vmem:[%s1 + $0x10] sm:$0xff]
    %v24 = vld [vmem:[%s1 + $0x18] sm:$0xff]
    %v25 = vld [vmem:[%s1 + $0x20] sm:$0xff]
    %v26 = vld [vmem:[%s1 + $0x28] sm:$0xff]
    %v27 = vld [vmem:[%s1 + $0x30] sm:$0x3]
    %v28 = vld [vmem:[%s0] sm:$0x1]
    %30 = vset.pattern.permute.xlu0 0
    %31 = vperm.xlu0 %30, %v21
    %v32 = vpop.permute.xlu0 %31
    %35 = vset.pattern.permute.xlu0 0
    %36 = vperm.xlu0 %35, %v22
    %v37 = vpop.permute.xlu0 %36
    %40 = vset.pattern.permute.xlu0 0
    %41 = vperm.xlu0 %40, %v23
    %v42 = vpop.permute.xlu0 %41
    %45 = vset.pattern.permute.xlu0 0
    %46 = vperm.xlu0 %45, %v24
    %v47 = vpop.permute.xlu0 %46
    %50 = vset.pattern.permute.xlu0 0
    %51 = vperm.xlu0 %50, %v25
    %v52 = vpop.permute.xlu0 %51
    %55 = vset.pattern.permute.xlu0 0
    %56 = vperm.xlu0 %55, %v26
    %v57 = vpop.permute.xlu0 %56
    %60 = vset.pattern.permute.xlu0 0
    %61 = vperm.xlu0 %60, %v27
    %v62 = vpop.permute.xlu0 %61
    %v64 = vlaneseq
    %v65 = vshrl.u32 %v64, 7
    %v66 = vsub.s32 0, %v65
    %v67 = vrot.slane %v28, %v66
    %v68 = vmul.f32 %v32, %v67
    %v69 = vmul.f32 %v37, %v67
    %v70 = vmul.f32 %v42, %v67
    %v71 = vmul.f32 %v47, %v67
    %v72 = vmul.f32 %v52, %v67
    %v73 = vmul.f32 %v57, %v67
    %v74 = vmul.f32 %v62, %v67
    %v75 = vld [vmem:[%s0 + $0x1] sm:$0x1]
    %76 = vset.pattern.permute.xlu0 1
    %77 = vperm.xlu0 %76, %v21
    %v78 = vpop.permute.xlu0 %77
    %80 = vset.pattern.permute.xlu0 1
    %81 = vperm.xlu0 %80, %v22
    %v82 = vpop.permute.xlu0 %81
    %84 = vset.pattern.permute.xlu0 1
    %85 = vperm.xlu0 %84, %v23
    %v86 = vpop.permute.xlu0 %85
    %88 = vset.pattern.permute.xlu0 1
    %89 = vperm.xlu0 %88, %v24
    %v90 = vpop.permute.xlu0 %89
    %92 = vset.pattern.permute.xlu0 1
    %93 = vperm.xlu0 %92, %v25
    %v94 = vpop.permute.xlu0 %93
    %96 = vset.pattern.permute.xlu0 1
    %97 = vperm.xlu0 %96, %v26
    %v98 = vpop.permute.xlu0 %97
    %100 = vset.pattern.permute.xlu0 1
    %101 = vperm.xlu0 %100, %v27
    %v102 = vpop.permute.xlu0 %101
    %v104 = vlaneseq
    %v105 = vshrl.u32 %v104, 7
    %v106 = vsub.s32 0, %v105
    %v107 = vrot.slane %v75, %v106
    %v108 = vmul.f32 %v78, %v107
    %v109 = vmul.f32 %v82, %v107
    %v110 = vmul.f32 %v86, %v107
    %v111 = vmul.f32 %v90, %v107
    %v112 = vmul.f32 %v94, %v107
    %v113 = vmul.f32 %v98, %v107
    %v114 = vmul.f32 %v102, %v107
    %v115 = vadd.f32 %v68, %v108
    %v116 = vadd.f32 %v69, %v109
    %v117 = vadd.f32 %v70, %v110
    %v118 = vadd.f32 %v71, %v111
    %v119 = vadd.f32 %v72, %v112
    %v120 = vadd.f32 %v73, %v113
    %v121 = vadd.f32 %v74, %v114
    %v122 = vld [vmem:[%s2] sm:$0xff]
    %v123 = vld [vmem:[%s2 + $0x8] sm:$0xff]
    %v124 = vld [vmem:[%s2 + $0x10] sm:$0xff]
    %v125 = vld [vmem:[%s2 + $0x18] sm:$0xff]
    %v126 = vld [vmem:[%s2 + $0x20] sm:$0xff]
    %v127 = vld [vmem:[%s2 + $0x28] sm:$0xff]
    %v128 = vld [vmem:[%s2 + $0x30] sm:$0x3]
    %130 = vset.pattern.permute.xlu0 0
    %131 = vperm.xlu0 %130, %v122
    %v132 = vpop.permute.xlu0 %131
    %135 = vset.pattern.permute.xlu0 0
    %136 = vperm.xlu0 %135, %v123
    %v137 = vpop.permute.xlu0 %136
    %140 = vset.pattern.permute.xlu0 0
    %141 = vperm.xlu0 %140, %v124
    %v142 = vpop.permute.xlu0 %141
    %145 = vset.pattern.permute.xlu0 0
    %146 = vperm.xlu0 %145, %v125
    %v147 = vpop.permute.xlu0 %146
    %150 = vset.pattern.permute.xlu0 0
    %151 = vperm.xlu0 %150, %v126
    %v152 = vpop.permute.xlu0 %151
    %155 = vset.pattern.permute.xlu0 0
    %156 = vperm.xlu0 %155, %v127
    %v157 = vpop.permute.xlu0 %156
    %160 = vset.pattern.permute.xlu0 0
    %161 = vperm.xlu0 %160, %v128
    %v162 = vpop.permute.xlu0 %161
    %v164 = vadd.f32 %v115, %v132
    %v165 = vadd.f32 %v116, %v137
    %v166 = vadd.f32 %v117, %v142
    %v167 = vadd.f32 %v118, %v147
    %v168 = vadd.f32 %v119, %v152
    %v169 = vadd.f32 %v120, %v157
    %v170 = vadd.f32 %v121, %v162
    %v171 = vtanh.pop %v164
    %v172 = vtanh.pop %v165
    %v173 = vtanh.pop %v166
    %v174 = vtanh.pop %v167
    %v175 = vtanh.pop %v168
    %v176 = vtanh.pop %v169
    %v177 = vtanh.pop %v170
    %v178 = vld [vmem:[%s3] sm:$0x3]
    %v179 = vld [vmem:[%s4] sm:$0x3]
    %181 = vset.pattern.permute.xlu0 0
    %182 = vperm.xlu0 %181, %v179
    %v183 = vpop.permute.xlu0 %182
    %vm185 = vcmask 408576
    %v187 = vsel %vm185, %v178, 0
    %vm189 = vcmask 1041408
    %v191 = vsel %vm189, %v177, 0
    %193 = vmatprep.subr.mxu0 0.0
    %194 = vmatpush1.msra.mxu0 0.0
    %195 = vmatprep.subr.mxu0 0.0
    %196 = vmatpush1.msra.mxu0 0.0
    %197 = vmatprep.subr.mxu0 0.0
    %198 = vmatpush1.msra.mxu0 0.0
    %199 = vmatprep.subr.mxu0 0.0
    %200 = vmatpush1.msra.mxu0 0.0
    %201 = vmatprep.subr.mxu0 0.0
    %202 = vmatpush1.msra.mxu0 0.0
    %203 = vmatprep.subr.mxu0 0.0
    %204 = vmatpush1.msra.mxu0 0.0
    %205 = vmatprep.subr.mxu0 0.0
    %206 = vmatpush1.msra.mxu0 0.0
    %207 = vmatprep.subr.mxu0 0.0
    %208 = vmatpush1.msra.mxu0 0.0
    %209 = vmatprep.subr.mxu0 0.0
    %210 = vmatpush1.msra.mxu0 0.0
    %211 = vmatprep.subr.mxu0 0.0
    %v212 = vand.u32 %v191, 4294901760
    %213 = vmatpush1.msra.mxu0 %v212
    %214 = vmatprep.subr.mxu0 0.0
    %v215 = vand.u32 %v176, 4294901760
    %216 = vmatpush1.msra.mxu0 %v215
    %217 = vmatprep.subr.mxu0 0.0
    %v218 = vand.u32 %v175, 4294901760
    %219 = vmatpush1.msra.mxu0 %v218
    %220 = vmatprep.subr.mxu0 0.0
    %v221 = vand.u32 %v174, 4294901760
    %222 = vmatpush1.msra.mxu0 %v221
    %223 = vmatprep.subr.mxu0 0.0
    %v224 = vand.u32 %v173, 4294901760
    %225 = vmatpush1.msra.mxu0 %v224
    %226 = vmatprep.subr.mxu0 0.0
    %v227 = vand.u32 %v172, 4294901760
    %228 = vmatpush1.msra.mxu0 %v227
    %229 = vmatprep.subr.mxu0 0.0
    %v230 = vand.u32 %v171, 4294901760
    %231 = vmatpush1.msra.mxu0 %v230
    %232 = vmatprep.subr.mxu0 0.0
    %233 = vmatpush2.msra.mxu0 0.0
    %234 = vmatprep.subr.mxu0 0.0
    %235 = vmatpush2.msra.mxu0 0.0
    %236 = vmatprep.subr.mxu0 0.0
    %237 = vmatpush2.msra.mxu0 0.0
    %238 = vmatprep.subr.mxu0 0.0
    %239 = vmatpush2.msra.mxu0 0.0
    %240 = vmatprep.subr.mxu0 0.0
    %241 = vmatpush2.msra.mxu0 0.0
    %242 = vmatprep.subr.mxu0 0.0
    %243 = vmatpush2.msra.mxu0 0.0
    %244 = vmatprep.subr.mxu0 0.0
    %245 = vmatpush2.msra.mxu0 0.0
    %246 = vmatprep.subr.mxu0 0.0
    %247 = vmatpush2.msra.mxu0 0.0
    %248 = vmatprep.subr.mxu0 0.0
    %249 = vmatpush2.msra.mxu0 0.0
    %250 = vmatprep.subr.mxu0 0.0
    %251 = vmatpush2.msra.mxu0 0.0
    %252 = vmatprep.subr.mxu0 0.0
    %253 = vmatpush2.msra.mxu0 0.0
    %254 = vmatprep.subr.mxu0 0.0
    %255 = vmatpush2.msra.mxu0 0.0
    %256 = vmatprep.subr.mxu0 0.0
    %257 = vmatpush2.msra.mxu0 0.0
    %258 = vmatprep.subr.mxu0 0.0
    %259 = vmatpush2.msra.mxu0 0.0
    %260 = vmatprep.subr.mxu0 0.0
    %261 = vmatpush2.msra.mxu0 0.0
    %262 = vmatprep.subr.mxu0 0.0
    %263 = vmatpush2.msra.mxu0 0.0
    %264 = vmatprep.mubr.f32.mxu0 0.0
    %v265 = vand.u32 %v187, 4294901760
    %v266 = vsub.f32 %v187, %v265
    %v267 = vand.u32 %v266, 4294901760
    %v268 = vsub.f32 %v266, %v267
    %v269 = vand.u32 %v268, 4294901760
    %270 = vmatmul.mubr.f32.gmra.mxu0 %v269
    %v271 = vpop.f32.mrf.mxu0
    %v272 = vadd.f32 %v183, %v271
    %v273 = vpop.f32.mrf.mxu0
    %274 = vdwg.mxu0
    %275 = vmatprep.subr.mxu0 0.0
    %276 = vmatpush1.msra.mxu0 0.0
    %277 = vmatprep.subr.mxu0 0.0
    %278 = vmatpush1.msra.mxu0 0.0
    %279 = vmatprep.subr.mxu0 0.0
    %280 = vmatpush1.msra.mxu0 0.0
    %281 = vmatprep.subr.mxu0 0.0
    %282 = vmatpush1.msra.mxu0 0.0
    %283 = vmatprep.subr.mxu0 0.0
    %284 = vmatpush1.msra.mxu0 0.0
    %285 = vmatprep.subr.mxu0 0.0
    %286 = vmatpush1.msra.mxu0 0.0
    %287 = vmatprep.subr.mxu0 0.0
    %288 = vmatpush1.msra.mxu0 0.0
    %289 = vmatprep.subr.mxu0 0.0
    %290 = vmatpush1.msra.mxu0 0.0
    %291 = vmatprep.subr.mxu0 0.0
    %292 = vmatpush1.msra.mxu0 0.0
    %293 = vmatprep.subr.mxu0 0.0
    %v294 = vand.u32 %v191, 4294901760
    %v295 = vsub.f32 %v191, %v294
    %v296 = vand.u32 %v295, 4294901760
    %v297 = vsub.f32 %v295, %v296
    %v298 = vand.u32 %v297, 4294901760
    %299 = vmatpush1.msra.mxu0 %v298
    %300 = vmatprep.subr.mxu0 0.0
    %v301 = vand.u32 %v176, 4294901760
    %v302 = vsub.f32 %v176, %v301
    %v303 = vand.u32 %v302, 4294901760
    %v304 = vsub.f32 %v302, %v303
    %v305 = vand.u32 %v304, 4294901760
    %306 = vmatpush1.msra.mxu0 %v305
    %307 = vmatprep.subr.mxu0 0.0
    %v308 = vand.u32 %v175, 4294901760
    %v309 = vsub.f32 %v175, %v308
    %v310 = vand.u32 %v309, 4294901760
    %v311 = vsub.f32 %v309, %v310
    %v312 = vand.u32 %v311, 4294901760
    %313 = vmatpush1.msra.mxu0 %v312
    %314 = vmatprep.subr.mxu0 0.0
    %v315 = vand.u32 %v174, 4294901760
    %v316 = vsub.f32 %v174, %v315
    %v317 = vand.u32 %v316, 4294901760
    %v318 = vsub.f32 %v316, %v317
    %v319 = vand.u32 %v318, 4294901760
    %320 = vmatpush1.msra.mxu0 %v319
    %321 = vmatprep.subr.mxu0 0.0
    %v322 = vand.u32 %v173, 4294901760
    %v323 = vsub.f32 %v173, %v322
    %v324 = vand.u32 %v323, 4294901760
    %v325 = vsub.f32 %v323, %v324
    %v326 = vand.u32 %v325, 4294901760
    %327 = vmatpush1.msra.mxu0 %v326
    %328 = vmatprep.subr.mxu0 0.0
    %v329 = vand.u32 %v172, 4294901760
    %v330 = vsub.f32 %v172, %v329
    %v331 = vand.u32 %v330, 4294901760
    %v332 = vsub.f32 %v330, %v331
    %v333 = vand.u32 %v332, 4294901760
    %334 = vmatpush1.msra.mxu0 %v333
    %335 = vmatprep.subr.mxu0 0.0
    %v336 = vand.u32 %v171, 4294901760
    %v337 = vsub.f32 %v171, %v336
    %v338 = vand.u32 %v337, 4294901760
    %v339 = vsub.f32 %v337, %v338
    %v340 = vand.u32 %v339, 4294901760
    %341 = vmatpush1.msra.mxu0 %v340
    %342 = vmatprep.subr.mxu0 0.0
    %343 = vmatpush2.msra.mxu0 0.0
    %344 = vmatprep.subr.mxu0 0.0
    %345 = vmatpush2.msra.mxu0 0.0
    %346 = vmatprep.subr.mxu0 0.0
    %347 = vmatpush2.msra.mxu0 0.0
    %348 = vmatprep.subr.mxu0 0.0
    %349 = vmatpush2.msra.mxu0 0.0
    %350 = vmatprep.subr.mxu0 0.0
    %351 = vmatpush2.msra.mxu0 0.0
    %352 = vmatprep.subr.mxu0 0.0
    %353 = vmatpush2.msra.mxu0 0.0
    %354 = vmatprep.subr.mxu0 0.0
    %355 = vmatpush2.msra.mxu0 0.0
    %356 = vmatprep.subr.mxu0 0.0
    %357 = vmatpush2.msra.mxu0 0.0
    %358 = vmatprep.subr.mxu0 0.0
    %359 = vmatpush2.msra.mxu0 0.0
    %360 = vmatprep.subr.mxu0 0.0
    %361 = vmatpush2.msra.mxu0 0.0
    %362 = vmatprep.subr.mxu0 0.0
    %363 = vmatpush2.msra.mxu0 0.0
    %364 = vmatprep.subr.mxu0 0.0
    %365 = vmatpush2.msra.mxu0 0.0
    %366 = vmatprep.subr.mxu0 0.0
    %367 = vmatpush2.msra.mxu0 0.0
    %368 = vmatprep.subr.mxu0 0.0
    %369 = vmatpush2.msra.mxu0 0.0
    %370 = vmatprep.subr.mxu0 0.0
    %371 = vmatpush2.msra.mxu0 0.0
    %372 = vmatprep.subr.mxu0 0.0
    %373 = vmatpush2.msra.mxu0 0.0
    %374 = vmatprep.mubr.f32.mxu0 0.0
    %v375 = vand.u32 %v187, 4294901760
    %376 = vmatmul.mubr.f32.gmra.mxu0 %v375
    %v377 = vpop.f32.mrf.mxu0
    %v378 = vadd.f32 %v272, %v377
    %v379 = vpop.f32.mrf.mxu0
    %380 = vdwg.mxu0
    %381 = vmatprep.subr.mxu0 0.0
    %382 = vmatpush1.msra.mxu0 0.0
    %383 = vmatprep.subr.mxu0 0.0
    %384 = vmatpush1.msra.mxu0 0.0
    %385 = vmatprep.subr.mxu0 0.0
    %386 = vmatpush1.msra.mxu0 0.0
    %387 = vmatprep.subr.mxu0 0.0
    %388 = vmatpush1.msra.mxu0 0.0
    %389 = vmatprep.subr.mxu0 0.0
    %390 = vmatpush1.msra.mxu0 0.0
    %391 = vmatprep.subr.mxu0 0.0
    %392 = vmatpush1.msra.mxu0 0.0
    %393 = vmatprep.subr.mxu0 0.0
    %394 = vmatpush1.msra.mxu0 0.0
    %395 = vmatprep.subr.mxu0 0.0
    %396 = vmatpush1.msra.mxu0 0.0
    %397 = vmatprep.subr.mxu0 0.0
    %398 = vmatpush1.msra.mxu0 0.0
    %399 = vmatprep.subr.mxu0 0.0
    %v400 = vand.u32 %v191, 4294901760
    %v401 = vsub.f32 %v191, %v400
    %402 = vmatpush1.msra.mxu0 %v401
    %403 = vmatprep.subr.mxu0 0.0
    %v404 = vand.u32 %v176, 4294901760
    %v405 = vsub.f32 %v176, %v404
    %406 = vmatpush1.msra.mxu0 %v405
    %407 = vmatprep.subr.mxu0 0.0
    %v408 = vand.u32 %v175, 4294901760
    %v409 = vsub.f32 %v175, %v408
    %410 = vmatpush1.msra.mxu0 %v409
    %411 = vmatprep.subr.mxu0 0.0
    %v412 = vand.u32 %v174, 4294901760
    %v413 = vsub.f32 %v174, %v412
    %414 = vmatpush1.msra.mxu0 %v413
    %415 = vmatprep.subr.mxu0 0.0
    %v416 = vand.u32 %v173, 4294901760
    %v417 = vsub.f32 %v173, %v416
    %418 = vmatpush1.msra.mxu0 %v417
    %419 = vmatprep.subr.mxu0 0.0
    %v420 = vand.u32 %v172, 4294901760
    %v421 = vsub.f32 %v172, %v420
    %422 = vmatpush1.msra.mxu0 %v421
    %423 = vmatprep.subr.mxu0 0.0
    %v424 = vand.u32 %v171, 4294901760
    %v425 = vsub.f32 %v171, %v424
    %426 = vmatpush1.msra.mxu0 %v425
    %427 = vmatprep.subr.mxu0 0.0
    %428 = vmatpush2.msra.mxu0 0.0
    %429 = vmatprep.subr.mxu0 0.0
    %430 = vmatpush2.msra.mxu0 0.0
    %431 = vmatprep.subr.mxu0 0.0
    %432 = vmatpush2.msra.mxu0 0.0
    %433 = vmatprep.subr.mxu0 0.0
    %434 = vmatpush2.msra.mxu0 0.0
    %435 = vmatprep.subr.mxu0 0.0
    %436 = vmatpush2.msra.mxu0 0.0
    %437 = vmatprep.subr.mxu0 0.0
    %438 = vmatpush2.msra.mxu0 0.0
    %439 = vmatprep.subr.mxu0 0.0
    %440 = vmatpush2.msra.mxu0 0.0
    %441 = vmatprep.subr.mxu0 0.0
    %442 = vmatpush2.msra.mxu0 0.0
    %443 = vmatprep.subr.mxu0 0.0
    %444 = vmatpush2.msra.mxu0 0.0
    %445 = vmatprep.subr.mxu0 0.0
    %446 = vmatpush2.msra.mxu0 0.0
    %447 = vmatprep.subr.mxu0 0.0
    %448 = vmatpush2.msra.mxu0 0.0
    %449 = vmatprep.subr.mxu0 0.0
    %450 = vmatpush2.msra.mxu0 0.0
    %451 = vmatprep.subr.mxu0 0.0
    %452 = vmatpush2.msra.mxu0 0.0
    %453 = vmatprep.subr.mxu0 0.0
    %454 = vmatpush2.msra.mxu0 0.0
    %455 = vmatprep.subr.mxu0 0.0
    %456 = vmatpush2.msra.mxu0 0.0
    %457 = vmatprep.subr.mxu0 0.0
    %458 = vmatpush2.msra.mxu0 0.0
    %459 = vmatprep.mubr.f32.mxu0 0.0
    %v460 = vand.u32 %v187, 4294901760
    %v461 = vsub.f32 %v187, %v460
    %462 = vmatmul.mubr.f32.gmra.mxu0 %v461
    %v463 = vpop.f32.mrf.mxu0
    %v464 = vadd.f32 %v378, %v463
    %v465 = vpop.f32.mrf.mxu0
    %466 = vdwg.mxu0
    %467 = vmatprep.subr.mxu0 0.0
    %468 = vmatpush1.msra.mxu0 0.0
    %469 = vmatprep.subr.mxu0 0.0
    %470 = vmatpush1.msra.mxu0 0.0
    %471 = vmatprep.subr.mxu0 0.0
    %472 = vmatpush1.msra.mxu0 0.0
    %473 = vmatprep.subr.mxu0 0.0
    %474 = vmatpush1.msra.mxu0 0.0
    %475 = vmatprep.subr.mxu0 0.0
    %476 = vmatpush1.msra.mxu0 0.0
    %477 = vmatprep.subr.mxu0 0.0
    %478 = vmatpush1.msra.mxu0 0.0
    %479 = vmatprep.subr.mxu0 0.0
    %480 = vmatpush1.msra.mxu0 0.0
    %481 = vmatprep.subr.mxu0 0.0
    %482 = vmatpush1.msra.mxu0 0.0
    %483 = vmatprep.subr.mxu0 0.0
    %484 = vmatpush1.msra.mxu0 0.0
    %485 = vmatprep.subr.mxu0 0.0
    %v486 = vand.u32 %v191, 4294901760
    %487 = vmatpush1.msra.mxu0 %v486
    %488 = vmatprep.subr.mxu0 0.0
    %v489 = vand.u32 %v176, 4294901760
    %490 = vmatpush1.msra.mxu0 %v489
    %491 = vmatprep.subr.mxu0 0.0
    %v492 = vand.u32 %v175, 4294901760
    %493 = vmatpush1.msra.mxu0 %v492
    %494 = vmatprep.subr.mxu0 0.0
    %v495 = vand.u32 %v174, 4294901760
    %496 = vmatpush1.msra.mxu0 %v495
    %497 = vmatprep.subr.mxu0 0.0
    %v498 = vand.u32 %v173, 4294901760
    %499 = vmatpush1.msra.mxu0 %v498
    %500 = vmatprep.subr.mxu0 0.0
    %v501 = vand.u32 %v172, 4294901760
    %502 = vmatpush1.msra.mxu0 %v501
    %503 = vmatprep.subr.mxu0 0.0
    %v504 = vand.u32 %v171, 4294901760
    %505 = vmatpush1.msra.mxu0 %v504
    %506 = vmatprep.subr.mxu0 0.0
    %507 = vmatpush2.msra.mxu0 0.0
    %508 = vmatprep.subr.mxu0 0.0
    %509 = vmatpush2.msra.mxu0 0.0
    %510 = vmatprep.subr.mxu0 0.0
    %511 = vmatpush2.msra.mxu0 0.0
    %512 = vmatprep.subr.mxu0 0.0
    %513 = vmatpush2.msra.mxu0 0.0
    %514 = vmatprep.subr.mxu0 0.0
    %515 = vmatpush2.msra.mxu0 0.0
    %516 = vmatprep.subr.mxu0 0.0
    %517 = vmatpush2.msra.mxu0 0.0
    %518 = vmatprep.subr.mxu0 0.0
    %519 = vmatpush2.msra.mxu0 0.0
    %520 = vmatprep.subr.mxu0 0.0
    %521 = vmatpush2.msra.mxu0 0.0
    %522 = vmatprep.subr.mxu0 0.0
    %523 = vmatpush2.msra.mxu0 0.0
    %524 = vmatprep.subr.mxu0 0.0
    %525 = vmatpush2.msra.mxu0 0.0
    %526 = vmatprep.subr.mxu0 0.0
    %527 = vmatpush2.msra.mxu0 0.0
    %528 = vmatprep.subr.mxu0 0.0
    %529 = vmatpush2.msra.mxu0 0.0
    %530 = vmatprep.subr.mxu0 0.0
    %531 = vmatpush2.msra.mxu0 0.0
    %532 = vmatprep.subr.mxu0 0.0
    %533 = vmatpush2.msra.mxu0 0.0
    %534 = vmatprep.subr.mxu0 0.0
    %535 = vmatpush2.msra.mxu0 0.0
    %536 = vmatprep.subr.mxu0 0.0
    %537 = vmatpush2.msra.mxu0 0.0
    %538 = vmatprep.mubr.f32.mxu0 0.0
    %v539 = vand.u32 %v187, 4294901760
    %v540 = vsub.f32 %v187, %v539
    %v541 = vand.u32 %v540, 4294901760
    %542 = vmatmul.mubr.f32.gmra.mxu0 %v541
    %v543 = vpop.f32.mrf.mxu0
    %v544 = vadd.f32 %v464, %v543
    %v545 = vpop.f32.mrf.mxu0
    %546 = vdwg.mxu0
    %547 = vmatprep.subr.mxu0 0.0
    %548 = vmatpush1.msra.mxu0 0.0
    %549 = vmatprep.subr.mxu0 0.0
    %550 = vmatpush1.msra.mxu0 0.0
    %551 = vmatprep.subr.mxu0 0.0
    %552 = vmatpush1.msra.mxu0 0.0
    %553 = vmatprep.subr.mxu0 0.0
    %554 = vmatpush1.msra.mxu0 0.0
    %555 = vmatprep.subr.mxu0 0.0
    %556 = vmatpush1.msra.mxu0 0.0
    %557 = vmatprep.subr.mxu0 0.0
    %558 = vmatpush1.msra.mxu0 0.0
    %559 = vmatprep.subr.mxu0 0.0
    %560 = vmatpush1.msra.mxu0 0.0
    %561 = vmatprep.subr.mxu0 0.0
    %562 = vmatpush1.msra.mxu0 0.0
    %563 = vmatprep.subr.mxu0 0.0
    %564 = vmatpush1.msra.mxu0 0.0
    %565 = vmatprep.subr.mxu0 0.0
    %v566 = vand.u32 %v191, 4294901760
    %v567 = vsub.f32 %v191, %v566
    %v568 = vand.u32 %v567, 4294901760
    %569 = vmatpush1.msra.mxu0 %v568
    %570 = vmatprep.subr.mxu0 0.0
    %v571 = vand.u32 %v176, 4294901760
    %v572 = vsub.f32 %v176, %v571
    %v573 = vand.u32 %v572, 4294901760
    %574 = vmatpush1.msra.mxu0 %v573
    %575 = vmatprep.subr.mxu0 0.0
    %v576 = vand.u32 %v175, 4294901760
    %v577 = vsub.f32 %v175, %v576
    %v578 = vand.u32 %v577, 4294901760
    %579 = vmatpush1.msra.mxu0 %v578
    %580 = vmatprep.subr.mxu0 0.0
    %v581 = vand.u32 %v174, 4294901760
    %v582 = vsub.f32 %v174, %v581
    %v583 = vand.u32 %v582, 4294901760
    %584 = vmatpush1.msra.mxu0 %v583
    %585 = vmatprep.subr.mxu0 0.0
    %v586 = vand.u32 %v173, 4294901760
    %v587 = vsub.f32 %v173, %v586
    %v588 = vand.u32 %v587, 4294901760
    %589 = vmatpush1.msra.mxu0 %v588
    %590 = vmatprep.subr.mxu0 0.0
    %v591 = vand.u32 %v172, 4294901760
    %v592 = vsub.f32 %v172, %v591
    %v593 = vand.u32 %v592, 4294901760
    %594 = vmatpush1.msra.mxu0 %v593
    %595 = vmatprep.subr.mxu0 0.0
    %v596 = vand.u32 %v171, 4294901760
    %v597 = vsub.f32 %v171, %v596
    %v598 = vand.u32 %v597, 4294901760
    %599 = vmatpush1.msra.mxu0 %v598
    %600 = vmatprep.subr.mxu0 0.0
    %601 = vmatpush2.msra.mxu0 0.0
    %602 = vmatprep.subr.mxu0 0.0
    %603 = vmatpush2.msra.mxu0 0.0
    %604 = vmatprep.subr.mxu0 0.0
    %605 = vmatpush2.msra.mxu0 0.0
    %606 = vmatprep.subr.mxu0 0.0
    %607 = vmatpush2.msra.mxu0 0.0
    %608 = vmatprep.subr.mxu0 0.0
    %609 = vmatpush2.msra.mxu0 0.0
    %610 = vmatprep.subr.mxu0 0.0
    %611 = vmatpush2.msra.mxu0 0.0
    %612 = vmatprep.subr.mxu0 0.0
    %613 = vmatpush2.msra.mxu0 0.0
    %614 = vmatprep.subr.mxu0 0.0
    %615 = vmatpush2.msra.mxu0 0.0
    %616 = vmatprep.subr.mxu0 0.0
    %617 = vmatpush2.msra.mxu0 0.0
    %618 = vmatprep.subr.mxu0 0.0
    %619 = vmatpush2.msra.mxu0 0.0
    %620 = vmatprep.subr.mxu0 0.0
    %621 = vmatpush2.msra.mxu0 0.0
    %622 = vmatprep.subr.mxu0 0.0
    %623 = vmatpush2.msra.mxu0 0.0
    %624 = vmatprep.subr.mxu0 0.0
    %625 = vmatpush2.msra.mxu0 0.0
    %626 = vmatprep.subr.mxu0 0.0
    %627 = vmatpush2.msra.mxu0 0.0
    %628 = vmatprep.subr.mxu0 0.0
    %629 = vmatpush2.msra.mxu0 0.0
    %630 = vmatprep.subr.mxu0 0.0
    %631 = vmatpush2.msra.mxu0 0.0
    %632 = vmatprep.mubr.f32.mxu0 0.0
    %v633 = vand.u32 %v187, 4294901760
    %634 = vmatmul.mubr.f32.gmra.mxu0 %v633
    %v635 = vpop.f32.mrf.mxu0
    %v636 = vadd.f32 %v544, %v635
    %v637 = vpop.f32.mrf.mxu0
    %638 = vdwg.mxu0
    %639 = vmatprep.subr.mxu0 0.0
    %640 = vmatpush1.msra.mxu0 0.0
    %641 = vmatprep.subr.mxu0 0.0
    %642 = vmatpush1.msra.mxu0 0.0
    %643 = vmatprep.subr.mxu0 0.0
    %644 = vmatpush1.msra.mxu0 0.0
    %645 = vmatprep.subr.mxu0 0.0
    %646 = vmatpush1.msra.mxu0 0.0
    %647 = vmatprep.subr.mxu0 0.0
    %648 = vmatpush1.msra.mxu0 0.0
    %649 = vmatprep.subr.mxu0 0.0
    %650 = vmatpush1.msra.mxu0 0.0
    %651 = vmatprep.subr.mxu0 0.0
    %652 = vmatpush1.msra.mxu0 0.0
    %653 = vmatprep.subr.mxu0 0.0
    %654 = vmatpush1.msra.mxu0 0.0
    %655 = vmatprep.subr.mxu0 0.0
    %656 = vmatpush1.msra.mxu0 0.0
    %657 = vmatprep.subr.mxu0 0.0
    %v658 = vand.u32 %v191, 4294901760
    %659 = vmatpush1.msra.mxu0 %v658
    %660 = vmatprep.subr.mxu0 0.0
    %v661 = vand.u32 %v176, 4294901760
    %662 = vmatpush1.msra.mxu0 %v661
    %663 = vmatprep.subr.mxu0 0.0
    %v664 = vand.u32 %v175, 4294901760
    %665 = vmatpush1.msra.mxu0 %v664
    %666 = vmatprep.subr.mxu0 0.0
    %v667 = vand.u32 %v174, 4294901760
    %668 = vmatpush1.msra.mxu0 %v667
    %669 = vmatprep.subr.mxu0 0.0
    %v670 = vand.u32 %v173, 4294901760
    %671 = vmatpush1.msra.mxu0 %v670
    %672 = vmatprep.subr.mxu0 0.0
    %v673 = vand.u32 %v172, 4294901760
    %674 = vmatpush1.msra.mxu0 %v673
    %675 = vmatprep.subr.mxu0 0.0
    %v676 = vand.u32 %v171, 4294901760
    %677 = vmatpush1.msra.mxu0 %v676
    %678 = vmatprep.subr.mxu0 0.0
    %679 = vmatpush2.msra.mxu0 0.0
    %680 = vmatprep.subr.mxu0 0.0
    %681 = vmatpush2.msra.mxu0 0.0
    %682 = vmatprep.subr.mxu0 0.0
    %683 = vmatpush2.msra.mxu0 0.0
    %684 = vmatprep.subr.mxu0 0.0
    %685 = vmatpush2.msra.mxu0 0.0
    %686 = vmatprep.subr.mxu0 0.0
    %687 = vmatpush2.msra.mxu0 0.0
    %688 = vmatprep.subr.mxu0 0.0
    %689 = vmatpush2.msra.mxu0 0.0
    %690 = vmatprep.subr.mxu0 0.0
    %691 = vmatpush2.msra.mxu0 0.0
    %692 = vmatprep.subr.mxu0 0.0
    %693 = vmatpush2.msra.mxu0 0.0
    %694 = vmatprep.subr.mxu0 0.0
    %695 = vmatpush2.msra.mxu0 0.0
    %696 = vmatprep.subr.mxu0 0.0
    %697 = vmatpush2.msra.mxu0 0.0
    %698 = vmatprep.subr.mxu0 0.0
    %699 = vmatpush2.msra.mxu0 0.0
    %700 = vmatprep.subr.mxu0 0.0
    %701 = vmatpush2.msra.mxu0 0.0
    %702 = vmatprep.subr.mxu0 0.0
    %703 = vmatpush2.msra.mxu0 0.0
    %704 = vmatprep.subr.mxu0 0.0
    %705 = vmatpush2.msra.mxu0 0.0
    %706 = vmatprep.subr.mxu0 0.0
    %707 = vmatpush2.msra.mxu0 0.0
    %708 = vmatprep.subr.mxu0 0.0
    %709 = vmatpush2.msra.mxu0 0.0
    %710 = vmatprep.mubr.f32.mxu0 0.0
    %v711 = vand.u32 %v187, 4294901760
    %712 = vmatmul.mubr.f32.gmra.mxu0 %v711
    %v713 = vpop.f32.mrf.mxu0
    %v714 = vadd.f32 %v636, %v713
    %v715 = vpop.f32.mrf.mxu0
    %716 = vdwg.mxu0
    %vm717 = vcmask 123904
    %718 = vst.msk [vmem:[#allocation2] sm:$0x3] %vm717, %v714
    // Predicated region
    $region22: #{tpu_custom_call.1} parent=1 // pred_check
      _
    $region23: #{tpu_custom_call.1} parent=1 // pred_check_branch
      %720 = sbr.rel (0) target = $region25
    $region24: #{tpu_custom_call.1} parent=1 // pred_region
      %s722 = ssub.s32 32, 32
      %723 = vsyncadd [#allocation3], %s722
      %s725 = sshll.u32 [#allocation2], 4
      %s726 = int_to_ptr.vmem [resolvable:$true] %s725
      %728 = dma.vmem_to_hbm [thread:$0]  %s726, 32, %s5, [#allocation3]
    $region25: #{tpu_custom_call.1} parent=1 // pred_fallthru
      _
    // Predicated region
    $region26: #{tpu_custom_call.1} parent=1 // pred_check
      _
    $region27: #{tpu_custom_call.1} parent=1 // pred_check_branch
      %730 = sbr.rel (0) target = $region29
    $region28: #{tpu_custom_call.1} parent=1 // pred_region
      %731 = dma.done [#allocation3], 32
    $region29: #{tpu_custom_call.1} parent=1 // pred_fallthru
      _
    %732 = vsyncpa [#allocation3], 1

</llo_original>
